<compile_context>
chip_gen: v7x
topology: tpu7x:2x2x1
jax: 0.10.0
libtpu: 0.0.40
codegen_flags: <defaults>
</compile_context>

<pallas_src>
import jax
import jax.numpy as jnp
from jax.experimental import pallas as pl
from jax.experimental.pallas import tpu as pltpu


_LANE = 128
_MIB = 1024 * 1024


def _round_up(v, m):
    return ((v + m - 1) // m) * m


def _vmem_capacity_bytes(default=64 * _MIB):
    """Physical VMEM per TensorCore; conservative (v7x-sized) fallback."""
    try:
        info = pltpu.get_tpu_info()
        cap = int(getattr(info, "vmem_capacity_bytes", 0) or 0)
        if cap > 0:
            return cap
    except Exception:
        pass
    return default


def prepare_category_linear_params(W, b, *, param_dtype=None):
    """One-time parameter prep (do NOT call per forward step).

    Pads the output dim up to a multiple of 128 (lane-dense W tiles / stores)
    and optionally down-casts W (e.g. bf16) so the kernel never pays a
    per-step weight cast and W HBM traffic is halved.
    """
    C, D_in, H = W.shape
    assert b.shape == (C, H)
    H_pad = _round_up(H, _LANE)
    if H_pad != H:
        W = jnp.pad(W, ((0, 0), (0, 0), (0, H_pad - H)))
        b = jnp.pad(b, ((0, 0), (0, H_pad - H)))
    if param_dtype is not None:
        W = W.astype(param_dtype)
    return {"W": W, "b": b.reshape(C, 1, H_pad), "H": H}


def _cat_linear_kernel(scat_ref, x_ref, w_ref, b_ref, o_ref):
    # scat_ref: (S,) int32 scalar-prefetch (consumed by the index_maps only).
    # x_ref: (1, rows, D_in)  w_ref: (1, D_in, h_tile)
    # b_ref: (1, 1, h_tile)   o_ref: (1, rows, h_tile)
    del scat_ref
    x = x_ref[0]                                   # (rows, D_in)
    w = w_ref[0]                                   # (D_in, h_tile)
    if x.dtype != w.dtype:                         # cheap: W was pre-cast at init
        x = x.astype(w.dtype)
    acc = jnp.dot(x, w, preferred_element_type=jnp.float32)   # MXU, f32 accum
    acc = acc + b_ref[0].astype(jnp.float32)       # (1, h_tile) broadcast over rows
    o_ref[0] = acc.astype(o_ref.dtype)


def category_specific_linear(x, cat_ids, params, *, rows_target=256,
                             max_h_tile=None, interpret=False):
    """out[b] = x[b] @ W[cat_ids[b]] + b[cat_ids[b]]   (Pallas TPU)."""
    W = params["W"]
    b3 = params["b"]
    H = params["H"]
    B, T, D_in = x.shape
    C, D_in_w, H_pad = W.shape
    assert D_in_w == D_in and b3.shape == (C, 1, H_pad)

    w_isz = jnp.dtype(W.dtype).itemsize
    x_isz = jnp.dtype(x.dtype).itemsize
    o_isz = x_isz
    b_isz = jnp.dtype(b3.dtype).itemsize

    # ---- static tiling decisions (generation-aware VMEM budget) -------------
    vmem_cap = _vmem_capacity_bytes()                    # 64 MiB (v7x) / 128 MiB (v5e/v6e)
    vmem_limit = int(min(vmem_cap * 3 // 4, 96 * _MIB))  # explicit scoped-VMEM limit
    usable = int(vmem_limit * 0.6)                       # head-room for compiler scratch
    w_budget = int(max(1 * _MIB, min(vmem_cap // 16, 8 * _MIB)))

    # Rows per grid step: pack G same-category batch elements so G*T ~ MXU height.
    G = 1 if T >= rows_target else max(1, min(rows_target // T, B))

    h_candidates = [k * _LANE for k in range(H_pad // _LANE, 0, -1)
                    if H_pad % (k * _LANE) == 0]
    if max_h_tile is not None:
        h_candidates = [h for h in h_candidates if h <= max_h_tile] or [_LANE]

    def _need(g, ht):  # double-buffered W/x/out blocks + bias block
        rows_ = g * T
        return (2 * (D_in * ht * w_isz + rows_ * D_in * x_isz + rows_ * ht * o_isz)
                + 2 * ht * b_isz)

    def _pick(g):
        for ht in h_candidates:
            if D_in * ht * w_isz <= w_budget and _need(g, ht) <= usable:
                return ht
        for ht in h_candidates:
            if _need(g, ht) <= usable:
                return ht
        return None

    h_tile = _pick(G)
    while h_tile is None and G > 1:
        G = max(1, G // 2)
        h_tile = _pick(G)
    if h_tile is None:
        h_tile = _LANE
    n_h = H_pad // h_tile
    rows = G * T

    # ---- grouped-by-category schedule (all array shapes are static) ---------
    cat_ids = jnp.clip(cat_ids.astype(jnp.int32), 0, C - 1)
    perm = jnp.argsort(cat_ids).astype(jnp.int32)               # (B,)
    scat = jnp.take(cat_ids, perm)                              # sorted categories
    idx = jnp.arange(B, dtype=jnp.int32)
    run_start = jnp.searchsorted(scat, scat, side="left").astype(jnp.int32)
    run_id = jnp.cumsum((idx == run_start).astype(jnp.int32)) - 1
    within = idx - run_start                                    # rank inside category run
    run_len = jnp.zeros((B,), jnp.int32).at[run_id].add(1)
    blocks_per_run = (run_len + G - 1) // G
    block_off = jnp.concatenate(
        [jnp.zeros((1,), jnp.int32), jnp.cumsum(blocks_per_run)[:-1]])
    padded_pos = block_off[run_id] * G + within                 # pos in padded sorted order

    R_max = min(B, C)                                           # max #category runs
    S = min(B, R_max + (B - R_max) // G)                        # static bound on row blocks
    B_pad = S * G

    gather_idx = jnp.zeros((B_pad,), jnp.int32).at[padded_pos].set(perm)
    step_cat = jnp.zeros((S,), jnp.int32).at[padded_pos // G].set(scat)
    inv_pos = jnp.zeros((B,), jnp.int32).at[perm].set(padded_pos)

    x_g = jnp.take(x, gather_idx, axis=0).reshape(S, rows, D_in)  # MoE-style permute

    # ---- pallas call ---------------------------------------------------------
    grid_spec = pltpu.PrefetchScalarGridSpec(
        num_scalar_prefetch=1,
        grid=(n_h, S),  # h tiles lead (disjoint W columns per TC on v7x);
                        # sorted category runs innermost -> W re-DMA elided.
        in_specs=[
            pl.BlockSpec((1, rows, D_in), lambda j, s, cat_ref: (s, 0, 0)),
            pl.BlockSpec((1, D_in, h_tile), lambda j, s, cat_ref: (cat_ref[s], 0, j)),
            pl.BlockSpec((1, 1, h_tile), lambda j, s, cat_ref: (cat_ref[s], 0, j)),
        ],
        out_specs=pl.BlockSpec((1, rows, h_tile), lambda j, s, cat_ref: (s, 0, j)),
    )

    flops = 2 * B_pad * T * D_in * H_pad
    bytes_accessed = (n_h * B_pad * T * D_in * x_isz            # x (re-read per h tile)
                      + min(B, C) * D_in * H_pad * w_isz        # W ~once per category
                      + C * H_pad * b_isz                       # bias
                      + B_pad * T * H_pad * o_isz)              # out

    out_pad = pl.pallas_call(
        _cat_linear_kernel,
        out_shape=jax.ShapeDtypeStruct((S, rows, H_pad), x.dtype),
        grid_spec=grid_spec,
        compiler_params=pltpu.CompilerParams(
            dimension_semantics=("parallel", "parallel"),
            vmem_limit_bytes=vmem_limit,
        ),
        cost_estimate=pl.CostEstimate(
            flops=flops, transcendentals=0, bytes_accessed=bytes_accessed),
        interpret=interpret,
    )(step_cat, x_g, W, b3)

    # Un-permute (drops padded rows) and strip the H padding; both fuse into
    # one gather in XLA.
    out = jnp.take(out_pad.reshape(B_pad, T, H_pad), inv_pos, axis=0)
    return out[..., :H] if H_pad != H else out


if __name__ == "__main__":
    # Small, module-consistent shapes. hidden_dim=96 exercises the H->128 lane
    # padding; seq=16 with batch=5 exercises the grouped (G=5 -> 80-row) matmul.
    num_categories = 4
    input_dim = 48
    hidden_dim = 96
    batch = 5
    seq = 16

    key = jax.random.PRNGKey(0)
    k_w, k_x, k_c = jax.random.split(key, 3)

    # Parameter init mirroring the PyTorch __init__:
    #   W = 0.02 * randn(C, D_in, H), b = zeros(C, H)
    W = 0.02 * jax.random.normal(
        k_w, (num_categories, input_dim, hidden_dim), dtype=jnp.float32)
    b = jnp.zeros((num_categories, hidden_dim), dtype=jnp.float32)

    x = jax.random.normal(k_x, (batch, seq, input_dim), dtype=jnp.float32)
    cat_ids = jax.random.randint(k_c, (batch,), 0, num_categories,
                                 dtype=jnp.int32)

    # Pure-JAX reference (same semantics as torch.bmm + bias).
    ref = jnp.einsum("btd,bdh->bth", x, W[cat_ids]) + b[cat_ids][:, None, :]

    # 1) f32 params end-to-end: tight check.
    params_f32 = prepare_category_linear_params(W, b)
    out = jax.block_until_ready(category_specific_linear(x, cat_ids, params_f32))
    assert out.shape == (batch, seq, hidden_dim)
    assert jnp.allclose(out, ref, atol=2e-5, rtol=2e-5), "f32 mismatch vs ref"

    # 2) bf16 weights (pre-cast once at prep time), f32 accumulation: loose check.
    params_bf16 = prepare_category_linear_params(W, b, param_dtype=jnp.bfloat16)
    out_bf16 = jax.block_until_ready(
        category_specific_linear(x, cat_ids, params_bf16))
    assert jnp.allclose(out_bf16, ref, atol=1e-2, rtol=1e-2), \
        "bf16-weight mismatch vs ref"

    # 3) multi-h-tile path with a non-zero bias (forced 128-wide tiles).
    hidden2 = 256
    W2 = 0.02 * jax.random.normal(
        k_w, (num_categories, input_dim, hidden2), dtype=jnp.float32)
    b2 = 0.1 * jax.random.normal(
        k_c, (num_categories, hidden2), dtype=jnp.float32)
    ref2 = jnp.einsum("btd,bdh->bth", x, W2[cat_ids]) + b2[cat_ids][:, None, :]
    params2 = prepare_category_linear_params(W2, b2)
    out2 = jax.block_until_ready(
        category_specific_linear(x, cat_ids, params2, max_h_tile=128))
    assert jnp.allclose(out2, ref2, atol=2e-5, rtol=2e-5), \
        "multi-tile mismatch vs ref"

    print("KERNEL_OK")
</pallas_src>

<mosaic_0001>
module attributes {stable_mosaic.version = 11 : i64} {
  func.func @_cat_linear_kernel(%arg0: i32, %arg1: i32, %arg2: memref<4xi32, #tpu.memory_space<smem>>, %arg3: memref<1x80x48xf32, #tpu.memory_space<vmem>>, %arg4: memref<1x48x128xf32, #tpu.memory_space<vmem>>, %arg5: memref<1x1x128xf32, #tpu.memory_space<vmem>>, %arg6: memref<1x80x128xf32, #tpu.memory_space<vmem>>) attributes {dimension_semantics = [#tpu.dimension_semantics<parallel>, #tpu.dimension_semantics<parallel>], iteration_bounds = array<i64: 1, 4>, scalar_prefetch = 1 : i64, scratch_operands = 0 : i64, tpu.core_type = #tpu.core_type<tc>, window_params = [{transform_indices = @transform_0, window_bounds = array<i64: 1, 80, 48>}, {transform_indices = @transform_1, window_bounds = array<i64: 1, 48, 128>}, {transform_indices = @transform_2, window_bounds = array<i64: 1, 1, 128>}, {transform_indices = @transform_3, window_bounds = array<i64: 1, 80, 128>}]} {
    %c0 = arith.constant 0 : index
    %c0_0 = arith.constant 0 : index
    %c0_1 = arith.constant 0 : index
    %0 = vector.load %arg3[%c0, %c0_0, %c0_1] : memref<1x80x48xf32, #tpu.memory_space<vmem>>, vector<1x80x48xf32>
    %1 = vector.shape_cast %0 : vector<1x80x48xf32> to vector<80x48xf32>
    %c0_2 = arith.constant 0 : index
    %c0_3 = arith.constant 0 : index
    %c0_4 = arith.constant 0 : index
    %2 = vector.load %arg4[%c0_2, %c0_3, %c0_4] : memref<1x48x128xf32, #tpu.memory_space<vmem>>, vector<1x48x128xf32>
    %3 = vector.shape_cast %2 : vector<1x48x128xf32> to vector<48x128xf32>
    %cst = arith.constant dense<0.000000e+00> : vector<80x128xf32>
    %4 = tpu.matmul %1, %3, %cst {dimension_numbers = #tpu.dot_dimension_numbers<[1], [0], [0], [1], [0, 0, 1, 1], [], []>} : vector<80x48xf32>, vector<48x128xf32>, vector<80x128xf32> -> vector<80x128xf32>
    %c0_5 = arith.constant 0 : index
    %c0_6 = arith.constant 0 : index
    %c0_7 = arith.constant 0 : index
    %5 = vector.load %arg5[%c0_5, %c0_6, %c0_7] : memref<1x1x128xf32, #tpu.memory_space<vmem>>, vector<1x1x128xf32>
    %6 = vector.shape_cast %5 : vector<1x1x128xf32> to vector<1x128xf32>
    %7 = vector.broadcast %6 : vector<1x128xf32> to vector<80x128xf32>
    %8 = arith.addf %4, %7 : vector<80x128xf32>
    %c0_8 = arith.constant 0 : index
    %c0_9 = arith.constant 0 : index
    %c0_10 = arith.constant 0 : index
    %9 = vector.load %arg6[%c0_8, %c0_9, %c0_10] : memref<1x80x128xf32, #tpu.memory_space<vmem>>, vector<1x80x128xf32>
    %10 = vector.shape_cast %9 : vector<1x80x128xf32> to vector<80x128xf32>
    %11 = vector.shape_cast %8 : vector<80x128xf32> to vector<1x80x128xf32>
    tpu.vector_store %arg6[%c0_8, %c0_9, %c0_10], %11 {strides = array<i32>} : memref<1x80x128xf32, #tpu.memory_space<vmem>>, vector<1x80x128xf32>,
    return
  }
  func.func @transform_0(%arg0: i32, %arg1: i32, %arg2: memref<4xi32, #tpu.memory_space<smem>>) -> (i32, i32, i32) {
    %c0_i32 = arith.constant 0 : i32
    %c0_i32_0 = arith.constant 0 : i32
    %c0_i32_1 = arith.constant 0 : i32
    return %arg1, %c0_i32, %c0_i32_0 : i32, i32, i32
  }
  func.func @transform_1(%arg0: i32, %arg1: i32, %arg2: memref<4xi32, #tpu.memory_space<smem>>) -> (i32, i32, i32) {
    %0 = arith.index_cast %arg1 : i32 to index
    %1 = memref.load %arg2[%0] : memref<4xi32, #tpu.memory_space<smem>>
    %c0_i32 = arith.constant 0 : i32
    %c0_i32_0 = arith.constant 0 : i32
    return %1, %c0_i32, %arg0 : i32, i32, i32
  }
  func.func @transform_2(%arg0: i32, %arg1: i32, %arg2: memref<4xi32, #tpu.memory_space<smem>>) -> (i32, i32, i32) {
    %0 = arith.index_cast %arg1 : i32 to index
    %1 = memref.load %arg2[%0] : memref<4xi32, #tpu.memory_space<smem>>
    %c0_i32 = arith.constant 0 : i32
    %c0_i32_0 = arith.constant 0 : i32
    return %1, %c0_i32, %arg0 : i32, i32, i32
  }
  func.func @transform_3(%arg0: i32, %arg1: i32, %arg2: memref<4xi32, #tpu.memory_space<smem>>) -> (i32, i32, i32) {
    %c0_i32 = arith.constant 0 : i32
    %c0_i32_0 = arith.constant 0 : i32
    return %arg1, %c0_i32, %arg0 : i32, i32, i32
  }
}

</mosaic_0001>

<llo_original>
// kernel: tpu_custom_call.1
$region0: #{tpu_custom_call.1}
  #allocation0 [shape = 'u32[]', space=smem, size = 0x4, offset = 0x4, fixed_abs, tag = 'smem constant byte address 0x4 - core index']
  #allocation1 [shape = 'u32[144,128]{1,0:T(1,128)}', space=vmem, size = 0x12000, scoped, tag = 'internal scratch']
  #allocation2 [shape = 's32[1]{0}', space=sflag, size = 0x4, scoped, tag = 'scoped memory for tpu_custom_call.1']
  #allocation3 [shape = 'u8[512]{0}', space=smem, size = 0x200, scoped, tag = 'prefetched SMEM operand 0']
  %s0 = inlined_call_operand.vmem [shape: s32[4], index: 0, kind: input, shape index: {}]
  %s1 = inlined_call_operand.vmem [shape: f32[4,80,48], index: 1, kind: input, shape index: {}]
  %s2 = inlined_call_operand.vmem [shape: f32[4,48,128], index: 2, kind: input, shape index: {}]
  %s3 = inlined_call_operand.vmem [shape: f32[4,1,128], index: 3, kind: input, shape index: {}]
  %s4 = inlined_call_operand.hbm [shape: f32[4,80,128], index: 4, kind: output, shape index: {}]
  %s5 = sld [smem:[#allocation0]]
  $region45: #{tpu_custom_call.1} parent=0
    _
  %s7 = ssub.s32 1, %s5
  %s8 = scalar_select 0, %s7, %s5
  %s9 = sshll.u32 %s0, 4
  %s10 = int_to_ptr.vmem [resolvable:$true] %s9
  %12 = dma.vmem_to_smem %s10, 16, [#allocation3], [#allocation2]
  %13 = dma.done [#allocation2], 16
  %14 = sfence
  $region1: #{tpu_custom_call.1} parent=0
    #allocation4 [shape = 'u8[81920]{0}', space=vmem, size = 0x14000, scoped, tag = 'output window, operand 0']
    #allocation5 [shape = 's32[2]{0}', space=sflag, size = 0x8, scoped, tag = 'scoped memory for tpu_custom_call.1']
    %15 = vsyncpa [#allocation5], 0
    %s16 = scalar_lea.sflag [#allocation5], 1
    %17 = vsyncpa %s16, 0
    loop: start=0, step=1, limit=6
    $region2: #{tpu_custom_call.1} parent=1 // loop_pre_header
      _
    $region3: #{tpu_custom_call.1} parent=1 // loop_header
      %s19 = sphi 0, %s23
      %p20 = scmp.ge.s32.totalorder %s19, 6
      %s26 = sphi 0, %s38
      %s27 = sphi 0, %s34
      %s28 = sphi 0, %s26
      %s29 = sphi 0, %s27
      %s30 = sphi 0, %s28
      %s31 = sphi 0, %s29
      %s41 = sphi 0, %s43
      %s44 = sphi 0, %s41
      %s45 = sphi 0, %s44
      %s61 = sphi 0, %s45
      %s71 = sphi 0, %s73
      %s74 = sphi 0, %s71
      %s75 = sphi 0, %s74
      %s91 = sphi 0, %s75
      %s101 = sphi 0, %s103
      %s104 = sphi 0, %s101
      %s105 = sphi 0, %s104
      %s121 = sphi 0, %s105
      %s129 = sphi 0, %s131
      %s132 = sphi 0, %s129
      %s133 = sphi 0, %s132
      %s149 = sphi 0, %s133
    $region4: #{tpu_custom_call.1} parent=1 // loop_header_branch
      %22 = sbr.rel (%p20) target = $region8
    $region5: #{tpu_custom_call.1} parent=1 // loop_body
      %s24 = ssub.s32 %s19, 1
      %s25 = ssub.s32 %s19, 2
      %s32 = sadd.s32 1, %s27
      %p33 = scmp.ge.s32.totalorder %s32, 4
      %s34 = scalar_select %p33, 0, %s32
      %s35 = sadd.s32 1, %s26
      %s36 = scalar_select %p33, %s35, %s26
      %p37 = scmp.ge.s32.totalorder %s36, 1
      %s38 = scalar_select %p37, 0, %s36
      %s39 = ssub.s32 %s27, %s34
      %p40 = scmp.eq.s32.totalorder %s39, 0
      %s42 = sadd.s32 %s41, 1
      %s43 = scalar_select %p40, %s41, %s42
      %p46 = pneg %p40
      %p47 = scmp.eq.s32.totalorder %s19, 3
      %p48 = por %p46, %p47
      %p49 = scmp.ne.s32.totalorder %s41, %s44
      %p50 = scmp.eq.s32.totalorder %s19, 0
      %p51 = por %p49, %p50
      %p52 = scmp.ne.s32.totalorder %s41, %s44
      %p53 = scmp.eq.s32.totalorder %s24, 3
      %p54 = por %p52, %p53
      %p55 = scmp.ne.s32.totalorder %s44, %s45
      %p56 = scmp.eq.s32.totalorder %s24, 0
      %p57 = por %p55, %p56
      %p58 = scmp.ne.s32.totalorder %s44, %s45
      %p59 = scmp.eq.s32.totalorder %s25, 3
      %p60 = por %p58, %p59
      %p62 = scmp.ne.s32.totalorder %s45, %s61
      %p63 = scmp.eq.s32.totalorder %s25, 0
      %p64 = por %p62, %p63
      %s65 = sld [smem:[#allocation3 + %s27]]
      %s66 = sld [smem:[#allocation3 + %s34]]
      %s67 = ssub.s32 %s65, %s66
      %s68 = ssub.s32 %s26, %s38
      %s69 = sor.u32 %s67, %s68
      %p70 = scmp.eq.s32.totalorder %s69, 0
      %s72 = sadd.s32 %s71, 1
      %s73 = scalar_select %p70, %s71, %s72
      %p76 = pneg %p70
      %p77 = scmp.eq.s32.totalorder %s19, 3
      %p78 = por %p76, %p77
      %p79 = scmp.ne.s32.totalorder %s71, %s74
      %p80 = scmp.eq.s32.totalorder %s19, 0
      %p81 = por %p79, %p80
      %p82 = scmp.ne.s32.totalorder %s71, %s74
      %p83 = scmp.eq.s32.totalorder %s24, 3
      %p84 = por %p82, %p83
      %p85 = scmp.ne.s32.totalorder %s74, %s75
      %p86 = scmp.eq.s32.totalorder %s24, 0
      %p87 = por %p85, %p86
      %p88 = scmp.ne.s32.totalorder %s74, %s75
      %p89 = scmp.eq.s32.totalorder %s25, 3
      %p90 = por %p88, %p89
      %p92 = scmp.ne.s32.totalorder %s75, %s91
      %p93 = scmp.eq.s32.totalorder %s25, 0
      %p94 = por %p92, %p93
      %s95 = sld [smem:[#allocation3 + %s27]]
      %s96 = sld [smem:[#allocation3 + %s34]]
      %s97 = ssub.s32 %s95, %s96
      %s98 = ssub.s32 %s26, %s38
      %s99 = sor.u32 %s97, %s98
      %p100 = scmp.eq.s32.totalorder %s99, 0
      %s102 = sadd.s32 %s101, 1
      %s103 = scalar_select %p100, %s101, %s102
      %p106 = pneg %p100
      %p107 = scmp.eq.s32.totalorder %s19, 3
      %p108 = por %p106, %p107
      %p109 = scmp.ne.s32.totalorder %s101, %s104
      %p110 = scmp.eq.s32.totalorder %s19, 0
      %p111 = por %p109, %p110
      %p112 = scmp.ne.s32.totalorder %s101, %s104
      %p113 = scmp.eq.s32.totalorder %s24, 3
      %p114 = por %p112, %p113
      %p115 = scmp.ne.s32.totalorder %s104, %s105
      %p116 = scmp.eq.s32.totalorder %s24, 0
      %p117 = por %p115, %p116
      %p118 = scmp.ne.s32.totalorder %s104, %s105
      %p119 = scmp.eq.s32.totalorder %s25, 3
      %p120 = por %p118, %p119
      %p122 = scmp.ne.s32.totalorder %s105, %s121
      %p123 = scmp.eq.s32.totalorder %s25, 0
      %p124 = por %p122, %p123
      %s125 = ssub.s32 %s27, %s34
      %s126 = ssub.s32 %s26, %s38
      %s127 = sor.u32 %s125, %s126
      %p128 = scmp.eq.s32.totalorder %s127, 0
      %s130 = sadd.s32 %s129, 1
      %s131 = scalar_select %p128, %s129, %s130
      %p134 = pneg %p128
      %p135 = scmp.eq.s32.totalorder %s19, 3
      %p136 = por %p134, %p135
      %p137 = scmp.ne.s32.totalorder %s129, %s132
      %p138 = scmp.eq.s32.totalorder %s19, 0
      %p139 = por %p137, %p138
      %p140 = scmp.ne.s32.totalorder %s129, %s132
      %p141 = scmp.eq.s32.totalorder %s24, 3
      %p142 = por %p140, %p141
      %p143 = scmp.ne.s32.totalorder %s132, %s133
      %p144 = scmp.eq.s32.totalorder %s24, 0
      %p145 = por %p143, %p144
      %p146 = scmp.ne.s32.totalorder %s132, %s133
      %p147 = scmp.eq.s32.totalorder %s25, 3
      %p148 = por %p146, %p147
      %p150 = scmp.ne.s32.totalorder %s133, %s149
      %p151 = scmp.eq.s32.totalorder %s25, 0
      %p152 = por %p150, %p151
      %p153 = scmp.le.s32.totalorder 1, %s19
      %p154 = scmp.lt.s32.totalorder %s19, 5
      %p155 = pnand %p153, %p154
      %p156 = pneg %p155
      // Predicated region
      $region9: #{tpu_custom_call.1} parent=5 // pred_check
        _
      $region10: #{tpu_custom_call.1} parent=5 // pred_check_branch
        %158 = sbr.rel (%p155) target = $region12
      $region11: #{tpu_custom_call.1} parent=5 // pred_region
        %s159 = ssub.s32 %s19, 1
      $region12: #{tpu_custom_call.1} parent=5 // pred_fallthru
        _
      %p160 = scmp.lt.s32.totalorder %s19, 4
      // Predicated region
      $region13: #{tpu_custom_call.1} parent=5 // pred_check
        %p161 = pneg %p160
      $region14: #{tpu_custom_call.1} parent=5 // pred_check_branch
        %163 = sbr.rel (%p161) target = $region16
      $region15: #{tpu_custom_call.1} parent=5 // pred_region
        // Predicated region
        $region17: #{tpu_custom_call.1} parent=15 // pred_check
          %p164 = pneg %p51
        $region18: #{tpu_custom_call.1} parent=15 // pred_check_branch
          %166 = sbr.rel (%p164) target = $region20
        $region19: #{tpu_custom_call.1} parent=15 // pred_region
          %p167 = scmp.lt.s32.totalorder %s27, 3
          %s168 = scalar_select %p167, %s27, 3
          %s169 = smul.addr %s168, 10
          %s170 = smul.addr %s169, 8
          %s171 = scalar_lea.vmem %s1, %s170
        $region20: #{tpu_custom_call.1} parent=15 // pred_fallthru
          _
        // Predicated region
        $region21: #{tpu_custom_call.1} parent=15 // pred_check
          %p172 = pneg %p81
        $region22: #{tpu_custom_call.1} parent=15 // pred_check_branch
          %174 = sbr.rel (%p172) target = $region24
        $region23: #{tpu_custom_call.1} parent=15 // pred_region
          %s175 = sld [smem:[#allocation3 + %s27]]
          %p176 = scmp.lt.s32.totalorder %s175, 3
          %s177 = scalar_select %p176, %s175, 3
          %p178 = scmp.lt.s32.totalorder %s26, 0
          %s179 = scalar_select %p178, %s26, 0
          %s180 = smul.addr %s177, 6
          %s181 = sadd.s32 %s179, %s180
          %s182 = smul.addr %s181, 8
          %s183 = scalar_lea.vmem %s2, %s182
          %s184 = sld [smem:[#allocation3 + %s27]]
        $region24: #{tpu_custom_call.1} parent=15 // pred_fallthru
          _
        // Predicated region
        $region25: #{tpu_custom_call.1} parent=15 // pred_check
          %p185 = pneg %p111
        $region26: #{tpu_custom_call.1} parent=15 // pred_check_branch
          %187 = sbr.rel (%p185) target = $region28
        $region27: #{tpu_custom_call.1} parent=15 // pred_region
          %s188 = sld [smem:[#allocation3 + %s27]]
          %p189 = scmp.lt.s32.totalorder %s188, 3
          %s190 = scalar_select %p189, %s188, 3
          %p191 = scmp.lt.s32.totalorder %s26, 0
          %s192 = scalar_select %p191, %s26, 0
          %s193 = sadd.s32 %s192, %s190
          %s194 = scalar_lea.vmem %s3, %s193
          %s195 = sld [smem:[#allocation3 + %s27]]
        $region28: #{tpu_custom_call.1} parent=15 // pred_fallthru
          _
      $region16: #{tpu_custom_call.1} parent=5 // pred_fallthru
        _
      %p196 = scmp.le.s32.totalorder 1, %s19
      %p197 = scmp.lt.s32.totalorder %s19, 5
      %p198 = pnand %p196, %p197
      %p199 = pneg %p198
      // Predicated region
      $region29: #{tpu_custom_call.1} parent=5 // pred_check
        _
      $region30: #{tpu_custom_call.1} parent=5 // pred_check_branch
        %201 = sbr.rel (%p198) target = $region32
      $region31: #{tpu_custom_call.1} parent=5 // pred_region
        %s202 = ssub.s32 %s19, 1
        %p203 = scmp.lt.s32.totalorder %s29, 3
        %s204 = scalar_select %p203, %s29, 3
        %s205 = smul.addr %s204, 10
        %s206 = smul.addr %s205, 8
        %s207 = scalar_lea.vmem %s1, %s206
        %p208 = pneg %p57
        %p209 = pneg %p54
        %s210 = sld [smem:[#allocation3 + %s29]]
        %p211 = scmp.lt.s32.totalorder %s210, 3
        %s212 = scalar_select %p211, %s210, 3
        %p213 = scmp.lt.s32.totalorder %s28, 0
        %s214 = scalar_select %p213, %s28, 0
        %s215 = smul.addr %s212, 6
        %s216 = sadd.s32 %s214, %s215
        %s217 = smul.addr %s216, 8
        %s218 = scalar_lea.vmem %s2, %s217
        %p219 = pneg %p87
        %p220 = pneg %p84
        %s221 = sld [smem:[#allocation3 + %s29]]
        %p222 = scmp.lt.s32.totalorder %s221, 3
        %s223 = scalar_select %p222, %s221, 3
        %p224 = scmp.lt.s32.totalorder %s28, 0
        %s225 = scalar_select %p224, %s28, 0
        %s226 = sadd.s32 %s225, %s223
        %s227 = scalar_lea.vmem %s3, %s226
        %p228 = pneg %p117
        %p229 = pneg %p114
        %p230 = pneg %p145
        %p231 = pneg %p142
        %s232 = sand.u32 %s132, 1
        %s233 = scalar_lea.sflag [#allocation5], %s232
        %s234 = sand.u32 %s132, 1
        %s235 = smul.addr %s234, 80
        %s236 = scalar_lea.vmem [#allocation4], %s235
        %p237 = scmp.lt.s32.totalorder %s29, 3
        %s238 = scalar_select %p237, %s29, 3
        %s239 = smul.addr %s238, 10
        %s240 = smul.addr %s239, 8
        %s241 = scalar_lea.vmem %s1, %s240
        %s242 = sld [smem:[#allocation3 + %s29]]
        %p243 = scmp.lt.s32.totalorder %s242, 3
        %s244 = scalar_select %p243, %s242, 3
        %p245 = scmp.lt.s32.totalorder %s28, 0
        %s246 = scalar_select %p245, %s28, 0
        %s247 = smul.addr %s244, 6
        %s248 = sadd.s32 %s246, %s247
        %s249 = smul.addr %s248, 8
        %s250 = scalar_lea.vmem %s2, %s249
        %s251 = sld [smem:[#allocation3 + %s29]]
        %s252 = sld [smem:[#allocation3 + %s29]]
        %p253 = scmp.lt.s32.totalorder %s252, 3
        %s254 = scalar_select %p253, %s252, 3
        %p255 = scmp.lt.s32.totalorder %s28, 0
        %s256 = scalar_select %p255, %s28, 0
        %s257 = sadd.s32 %s256, %s254
        %s258 = scalar_lea.vmem %s3, %s257
        %s259 = sld [smem:[#allocation3 + %s29]]
        %v260 = vld [vmem:[%s241] sm:$0xff]
        %v261 = vld [vmem:[%s241 + $0x8] sm:$0xff]
        %v262 = vld [vmem:[%s241 + $0x10] sm:$0xff]
        %v263 = vld [vmem:[%s241 + $0x18] sm:$0xff]
        %v264 = vld [vmem:[%s241 + $0x20] sm:$0xff]
        %v265 = vld [vmem:[%s241 + $0x28] sm:$0xff]
        %v266 = vld [vmem:[%s241 + $0x30] sm:$0xff]
        %v267 = vld [vmem:[%s241 + $0x38] sm:$0xff]
        %v268 = vld [vmem:[%s241 + $0x40] sm:$0xff]
        %v269 = vld [vmem:[%s241 + $0x48] sm:$0xff]
        %v270 = vld [vmem:[%s250] sm:$0xff]
        %v271 = vld [vmem:[%s250 + $0x8] sm:$0xff]
        %v272 = vld [vmem:[%s250 + $0x10] sm:$0xff]
        %v273 = vld [vmem:[%s250 + $0x18] sm:$0xff]
        %v274 = vld [vmem:[%s250 + $0x20] sm:$0xff]
        %v275 = vld [vmem:[%s250 + $0x28] sm:$0xff]
        %v276 = vld [vmem:[%s258] sm:$0x1]
        %v278 = vlaneseq
        %v279 = vshrl.u32 %v278, 7
        %v280 = vsub.s32 0, %v279
        %v281 = vrot.slane %v276, %v280
        %vm283 = vcmask 392192
        %v285 = vsel %vm283, %v260, 0
        %v288 = vsel %vm283, %v261, 0
        %v291 = vsel %vm283, %v262, 0
        %v294 = vsel %vm283, %v263, 0
        %v297 = vsel %vm283, %v264, 0
        %v300 = vsel %vm283, %v265, 0
        %v303 = vsel %vm283, %v266, 0
        %v306 = vsel %vm283, %v267, 0
        %v309 = vsel %vm283, %v268, 0
        %v312 = vsel %vm283, %v269, 0
        %314 = vmatprep.subr.mxu0 0.0
        %315 = vmatpush1.msra.mxu0 %v270
        %316 = vmatprep.subr.mxu0 0.0
        %317 = vmatpush1.msra.mxu0 %v271
        %318 = vmatprep.subr.mxu0 0.0
        %319 = vmatpush1.msra.mxu0 %v272
        %320 = vmatprep.subr.mxu0 0.0
        %321 = vmatpush1.msra.mxu0 %v273
        %322 = vmatprep.subr.mxu0 0.0
        %323 = vmatpush1.msra.mxu0 %v274
        %324 = vmatprep.subr.mxu0 0.0
        %325 = vmatpush1.msra.mxu0 %v275
        %326 = vmatprep.subr.mxu0 0.0
        %327 = vmatpush1.msra.mxu0 0.0
        %328 = vmatprep.subr.mxu0 0.0
        %329 = vmatpush1.msra.mxu0 0.0
        %330 = vmatprep.subr.mxu0 0.0
        %331 = vmatpush1.msra.mxu0 0.0
        %332 = vmatprep.subr.mxu0 0.0
        %333 = vmatpush1.msra.mxu0 0.0
        %334 = vmatprep.subr.mxu0 0.0
        %335 = vmatpush1.msra.mxu0 0.0
        %336 = vmatprep.subr.mxu0 0.0
        %337 = vmatpush1.msra.mxu0 0.0
        %338 = vmatprep.subr.mxu0 0.0
        %339 = vmatpush1.msra.mxu0 0.0
        %340 = vmatprep.subr.mxu0 0.0
        %341 = vmatpush1.msra.mxu0 0.0
        %342 = vmatprep.subr.mxu0 0.0
        %343 = vmatpush1.msra.mxu0 0.0
        %344 = vmatprep.subr.mxu0 0.0
        %345 = vmatpush1.msra.mxu0 0.0
        %346 = vmatprep.subr.mxu0 0.0
        %347 = vmatpush1.msra.mxu0 0.0
        %348 = vmatprep.subr.mxu0 0.0
        %349 = vmatpush1.msra.mxu0 0.0
        %350 = vmatprep.subr.mxu0 0.0
        %351 = vmatpush1.msra.mxu0 0.0
        %352 = vmatprep.subr.mxu0 0.0
        %353 = vmatpush1.msra.mxu0 0.0
        %354 = vmatprep.subr.mxu0 0.0
        %355 = vmatpush1.msra.mxu0 0.0
        %356 = vmatprep.subr.mxu0 0.0
        %357 = vmatpush1.msra.mxu0 0.0
        %358 = vmatprep.subr.mxu0 0.0
        %359 = vmatpush1.msra.mxu0 0.0
        %360 = vmatprep.subr.mxu0 0.0
        %361 = vmatpush1.msra.mxu0 0.0
        %362 = vmatprep.subr.mxu0 0.0
        %363 = vmatpush1.msra.mxu0 0.0
        %364 = vmatprep.subr.mxu0 0.0
        %365 = vmatpush1.msra.mxu0 0.0
        %366 = vmatprep.subr.mxu0 0.0
        %367 = vmatpush1.msra.mxu0 0.0
        %368 = vmatprep.subr.mxu0 0.0
        %369 = vmatpush1.msra.mxu0 0.0
        %370 = vmatprep.subr.mxu0 0.0
        %371 = vmatpush1.msra.mxu0 0.0
        %372 = vmatprep.subr.mxu0 0.0
        %373 = vmatpush1.msra.mxu0 0.0
        %374 = vmatprep.subr.mxu0 0.0
        %375 = vmatpush1.msra.mxu0 0.0
        %376 = vmatprep.subr.mxu0 0.0
        %377 = vmatpush1.msra.mxu0 0.0
        %378 = vmatprep.mubr.f32.mxu0 0.0
        %379 = vmatmul.mubr.f32.gmra.mrb[0].mxu0 %v285
        %v380 = vpop.f32.mrb[0].mxu0
        %v381 = vadd.f32 %v281, %v380
        %v382 = vpop.f32.mrb[0].mxu0
        %383 = vmatprep.mubr.f32.mxu0 0.0
        %384 = vmatmul.mubr.f32.gmra.mrb[0].mxu0 %v288
        %v385 = vpop.f32.mrb[0].mxu0
        %v386 = vadd.f32 %v281, %v385
        %v387 = vpop.f32.mrb[0].mxu0
        %388 = vmatprep.mubr.f32.mxu0 0.0
        %389 = vmatmul.mubr.f32.gmra.mrb[0].mxu0 %v291
        %v390 = vpop.f32.mrb[0].mxu0
        %v391 = vadd.f32 %v281, %v390
        %v392 = vpop.f32.mrb[0].mxu0
        %393 = vmatprep.mubr.f32.mxu0 0.0
        %394 = vmatmul.mubr.f32.gmra.mrb[0].mxu0 %v294
        %v395 = vpop.f32.mrb[0].mxu0
        %v396 = vadd.f32 %v281, %v395
        %v397 = vpop.f32.mrb[0].mxu0
        %398 = vmatprep.mubr.f32.mxu0 0.0
        %399 = vmatmul.mubr.f32.gmra.mrb[0].mxu0 %v297
        %v400 = vpop.f32.mrb[0].mxu0
        %v401 = vadd.f32 %v281, %v400
        %v402 = vpop.f32.mrb[0].mxu0
        %403 = vmatprep.mubr.f32.mxu0 0.0
        %404 = vmatmul.mubr.f32.gmra.mrb[0].mxu0 %v300
        %v405 = vpop.f32.mrb[0].mxu0
        %v406 = vadd.f32 %v281, %v405
        %v407 = vpop.f32.mrb[0].mxu0
        %408 = vmatprep.mubr.f32.mxu0 0.0
        %409 = vmatmul.mubr.f32.gmra.mrb[0].mxu0 %v303
        %v410 = vpop.f32.mrb[0].mxu0
        %v411 = vadd.f32 %v281, %v410
        %v412 = vpop.f32.mrb[0].mxu0
        %413 = vmatprep.mubr.f32.mxu0 0.0
        %414 = vmatmul.mubr.f32.gmra.mrb[0].mxu0 %v306
        %v415 = vpop.f32.mrb[0].mxu0
        %v416 = vadd.f32 %v281, %v415
        %v417 = vpop.f32.mrb[0].mxu0
        %418 = vmatprep.mubr.f32.mxu0 0.0
        %419 = vmatmul.mubr.f32.gmra.mrb[0].mxu0 %v309
        %v420 = vpop.f32.mrb[0].mxu0
        %v421 = vadd.f32 %v281, %v420
        %v422 = vpop.f32.mrb[0].mxu0
        %423 = vmatprep.mubr.f32.mxu0 0.0
        %424 = vmatmul.mubr.f32.gmra.mrb[0].mxu0 %v312
        %v425 = vpop.f32.mrb[0].mxu0
        %v426 = vadd.f32 %v281, %v425
        %v427 = vpop.f32.mrb[0].mxu0
        %428 = vdwg.mxu0
        %429 = vst [vmem:[%s236] sm:$0xff] %v381
        %430 = vst [vmem:[%s236 + $0x8] sm:$0xff] %v386
        %431 = vst [vmem:[%s236 + $0x10] sm:$0xff] %v391
        %432 = vst [vmem:[%s236 + $0x18] sm:$0xff] %v396
        %433 = vst [vmem:[%s236 + $0x20] sm:$0xff] %v401
        %434 = vst [vmem:[%s236 + $0x28] sm:$0xff] %v406
        %435 = vst [vmem:[%s236 + $0x30] sm:$0xff] %v411
        %436 = vst [vmem:[%s236 + $0x38] sm:$0xff] %v416
        %437 = vst [vmem:[%s236 + $0x40] sm:$0xff] %v421
        %438 = vst [vmem:[%s236 + $0x48] sm:$0xff] %v426
        %s439 = sand.u32 %s132, 1
        %s440 = scalar_lea.sflag [#allocation5], %s439
        %s441 = sand.u32 %s132, 1
        %s442 = smul.addr %s441, 80
        %s443 = scalar_lea.vmem [#allocation4], %s442
        // Predicated region
        $region33: #{tpu_custom_call.1} parent=31 // pred_check
          %p444 = pneg %p142
        $region34: #{tpu_custom_call.1} parent=31 // pred_check_branch
          %446 = sbr.rel (%p444) target = $region36
        $region35: #{tpu_custom_call.1} parent=31 // pred_region
          %s448 = ssub.s32 1280, 1280
          %449 = vsyncadd %s440, %s448
          %s450 = smul.addr %s29, 10
          %s451 = sadd.s32 %s28, %s450
          %s452 = smul.addr %s451, 128
          %s453 = scalar_lea.hbm %s4, %s452
          %s454 = sshll.u32 %s443, 4
          %s455 = int_to_ptr.vmem [resolvable:$true] %s454
          %460 = dma.vmem_to_hbm [thread:$0]  %s455, 1280, %s453, %s440, 128, 128, 8
        $region36: #{tpu_custom_call.1} parent=31 // pred_fallthru
          _
      $region32: #{tpu_custom_call.1} parent=5 // pred_fallthru
        _
      %p461 = scmp.le.s32.totalorder 2, %s19
      // Predicated region
      $region37: #{tpu_custom_call.1} parent=5 // pred_check
        %p462 = pneg %p461
      $region38: #{tpu_custom_call.1} parent=5 // pred_check_branch
        %464 = sbr.rel (%p462) target = $region40
      $region39: #{tpu_custom_call.1} parent=5 // pred_region
        %s465 = ssub.s32 %s19, 2
        // Predicated region
        $region41: #{tpu_custom_call.1} parent=39 // pred_check
          %p466 = pneg %p148
        $region42: #{tpu_custom_call.1} parent=39 // pred_check_branch
          %468 = sbr.rel (%p466) target = $region44
        $region43: #{tpu_custom_call.1} parent=39 // pred_region
          %s469 = sand.u32 %s133, 1
          %s470 = scalar_lea.sflag [#allocation5], %s469
          %s471 = sand.u32 %s133, 1
          %s472 = smul.addr %s471, 80
          %s473 = scalar_lea.vmem [#allocation4], %s472
          %474 = dma.done %s470, 1280
        $region44: #{tpu_custom_call.1} parent=39 // pred_fallthru
          _
      $region40: #{tpu_custom_call.1} parent=5 // pred_fallthru
        _
    $region6: #{tpu_custom_call.1} parent=1 // loop_footer
      %s23 = sadd.s32 1, %s19
    $region7: #{tpu_custom_call.1} parent=1 // loop_footer_branch
      %18 = sbr.rel target = $region3
    $region8: #{tpu_custom_call.1} parent=1 // loop_exit
      _
    %475 = vsyncpa [#allocation5], 1
    %s476 = scalar_lea.sflag [#allocation5], 1
    %477 = vsyncpa %s476, 1

</llo_original>
